<compile_context>
chip_gen: v7x
topology: tpu7x:2x2x1
jax: 0.10.0
libtpu: 0.0.40
codegen_flags: <defaults>
</compile_context>

<pallas_src>
import functools

import jax
import jax.numpy as jnp
from jax.experimental import pallas as pl
from jax.experimental.pallas import tpu as pltpu

EPS = 1e-08
_LANES = 128
_MAX_BLOCK_ROWS = 4096          # 4096 x 128 x 4B = 2 MiB per input block (f32)
_N_SPLIT = 2                    # leading "parallel" axis (v7x megacore; cheap elsewhere)


def _cdiv(a, b):
    return -(-a // b)


def _round_up(a, b):
    return _cdiv(a, b) * b


def _rmse_partial_kernel(yhat_ref, y_ref, psum_ref, *,
                         block_rows, blocks_per_split, valid_rows):
    """Accumulate per-core partial sum of squared errors into psum_ref (1,8,128)."""
    c = pl.program_id(0)          # parallel split id
    i = pl.program_id(1)          # streaming block id within this split

    @pl.when(i == 0)
    def _():
        psum_ref[...] = jnp.zeros_like(psum_ref)

    # Global (logical, unclamped) block id -> row offset of this block.
    b = c * blocks_per_split + i
    row0 = b * block_rows

    # Mask rows past the end of the slab (covers both the ragged last block
    # and fully-out-of-range blocks on the second split for tiny inputs).
    local_rows = jax.lax.broadcasted_iota(jnp.int32, (block_rows, _LANES), 0)
    mask = (local_rows + row0) < valid_rows

    d = yhat_ref[...].astype(jnp.float32) - y_ref[...].astype(jnp.float32)
    d = jnp.where(mask, d, 0.0)
    dd = d * d

    # Fold the whole block down to one (8, 128) vreg, touch the accumulator once.
    partial = dd.reshape(block_rows // 8, 8, _LANES).sum(axis=0)
    psum_ref[...] += partial[None, :, :]


def rmse_loss(yhat, y, eps=EPS):
    """sqrt(mean((yhat - y)**2) + eps), matching torch RMSELoss(reduction='mean')."""
    assert yhat.shape == y.shape, "yhat and y must have the same shape"
    total = 1
    for s in yhat.shape:
        total *= s

    yf = jnp.ravel(yhat)
    xf = jnp.ravel(y)

    # Reshape to a lane-dense 2D slab.  Only pad (zeros -> zero diff -> zero
    # contribution) in the rare case numel is not a multiple of 128.
    pad = (-total) % _LANES
    if pad:
        yf = jnp.pad(yf, (0, pad))
        xf = jnp.pad(xf, (0, pad))
    rows = (total + pad) // _LANES
    yf = yf.reshape(rows, _LANES)
    xf = xf.reshape(rows, _LANES)

    # Block / grid selection.
    block_rows = min(_MAX_BLOCK_ROWS, _round_up(rows, 8))
    total_blocks = _cdiv(rows, block_rows)
    blocks_per_split = _cdiv(total_blocks, _N_SPLIT)
    grid = (_N_SPLIT, blocks_per_split)

    # Clamp block indices in the index_map so DMAs stay in-bounds; the
    # in-kernel row mask (computed from the unclamped id) zeroes any
    # contribution from clamped / ragged blocks.
    def in_map(c, i):
        return (jnp.minimum(c * blocks_per_split + i, total_blocks - 1), 0)

    kernel = functools.partial(
        _rmse_partial_kernel,
        block_rows=block_rows,
        blocks_per_split=blocks_per_split,
        valid_rows=rows,
    )

    partials = pl.pallas_call(
        kernel,
        out_shape=jax.ShapeDtypeStruct((_N_SPLIT, 8, _LANES), jnp.float32),
        grid_spec=pltpu.PrefetchScalarGridSpec(
            num_scalar_prefetch=0,
            grid=grid,
            in_specs=[
                pl.BlockSpec((block_rows, _LANES), in_map),
                pl.BlockSpec((block_rows, _LANES), in_map),
            ],
            out_specs=pl.BlockSpec((1, 8, _LANES), lambda c, i: (c, 0, 0)),
        ),
        compiler_params=pltpu.CompilerParams(
            dimension_semantics=("parallel", "arbitrary"),
            vmem_limit_bytes=32 * 1024 * 1024,
        ),
    )(yf, xf)

    sse = jnp.sum(partials)
    return jnp.sqrt(sse / total + eps)


if __name__ == "__main__":
    key = jax.random.PRNGKey(0)
    k1, k2 = jax.random.split(key)
    # NCHW like PyTorch: batch=2, channels=4, spatial=16x16
    yhat = jax.random.normal(k1, (2, 4, 16, 16), dtype=jnp.float32)
    y = jax.random.normal(k2, (2, 4, 16, 16), dtype=jnp.float32)

    loss = rmse_loss(yhat, y)
    jax.block_until_ready(loss)

    # reference check in plain JAX
    ref = jnp.sqrt(jnp.mean((yhat - y) ** 2) + EPS)
    assert jnp.allclose(loss, ref, rtol=1e-5, atol=1e-6), (loss, ref)

    print("KERNEL_OK")
</pallas_src>

<mosaic_0001>
module attributes {stable_mosaic.version = 11 : i64} {
  func.func @_rmse_partial_kernel(%arg0: i32, %arg1: i32, %arg2: memref<16x128xf32, #tpu.memory_space<vmem>>, %arg3: memref<16x128xf32, #tpu.memory_space<vmem>>, %arg4: memref<1x8x128xf32, #tpu.memory_space<vmem>>) attributes {dimension_semantics = [#tpu.dimension_semantics<parallel>, #tpu.dimension_semantics<arbitrary>], iteration_bounds = array<i64: 2, 1>, scalar_prefetch = 0 : i64, scratch_operands = 0 : i64, tpu.core_type = #tpu.core_type<tc>, window_params = [{transform_indices = @transform_0, window_bounds = array<i64: 16, 128>}, {transform_indices = @transform_1, window_bounds = array<i64: 16, 128>}, {transform_indices = @transform_2, window_bounds = array<i64: 1, 8, 128>}]} {
    %c0_i32 = arith.constant 0 : i32
    %0 = arith.cmpi eq, %arg1, %c0_i32 : i32
    %1 = arith.extui %0 : i1 to i32
    %c0_i32_0 = arith.constant 0 : i32
    %2 = arith.cmpi ne, %1, %c0_i32_0 : i32
    scf.if %2 {
      %cst_12 = arith.constant 0.000000e+00 : f32
      %23 = vector.broadcast %cst_12 : f32 to vector<1x8x128xf32>
      %c0_13 = arith.constant 0 : index
      %c0_14 = arith.constant 0 : index
      %c0_15 = arith.constant 0 : index
      %24 = vector.load %arg4[%c0_13, %c0_14, %c0_15] : memref<1x8x128xf32, #tpu.memory_space<vmem>>, vector<1x8x128xf32>
      tpu.vector_store %arg4[%c0_13, %c0_14, %c0_15], %23 {strides = array<i32>} : memref<1x8x128xf32, #tpu.memory_space<vmem>>, vector<1x8x128xf32>,
    } else {
    }
    %c1_i32 = arith.constant 1 : i32
    %3 = arith.muli %arg0, %c1_i32 : i32
    %4 = arith.addi %3, %arg1 : i32
    %c16_i32 = arith.constant 16 : i32
    %5 = arith.muli %4, %c16_i32 : i32
    %6 = tpu.iota {dimensions = array<i32: 0>} : vector<16x128xi32>
    %7 = vector.broadcast %5 : i32 to vector<16x128xi32>
    %8 = arith.addi %6, %7 : vector<16x128xi32>
    %c16_i32_1 = arith.constant 16 : i32
    %9 = vector.broadcast %c16_i32_1 : i32 to vector<16x128xi32>
    %10 = arith.cmpi slt, %8, %9 : vector<16x128xi32>
    %c0 = arith.constant 0 : index
    %c0_2 = arith.constant 0 : index
    %11 = vector.load %arg2[%c0, %c0_2] : memref<16x128xf32, #tpu.memory_space<vmem>>, vector<16x128xf32>
    %c0_3 = arith.constant 0 : index
    %c0_4 = arith.constant 0 : index
    %12 = vector.load %arg3[%c0_3, %c0_4] : memref<16x128xf32, #tpu.memory_space<vmem>>, vector<16x128xf32>
    %13 = arith.subf %11, %12 : vector<16x128xf32>
    %cst = arith.constant 0.000000e+00 : f32
    %14 = vector.broadcast %cst : f32 to vector<16x128xf32>
    %15 = arith.select %10, %13, %14 : vector<16x128xi1>, vector<16x128xf32>
    %16 = arith.mulf %15, %15 : vector<16x128xf32>
    %17 = vector.shape_cast %16 : vector<16x128xf32> to vector<2x8x128xf32>
    %cst_5 = arith.constant dense<0.000000e+00> : vector<8x128xf32>
    %18 = vector.multi_reduction <add>, %17, %cst_5 [0] : vector<2x8x128xf32> to vector<8x128xf32>
    %c0_6 = arith.constant 0 : index
    %c0_7 = arith.constant 0 : index
    %c0_8 = arith.constant 0 : index
    %19 = vector.load %arg4[%c0_6, %c0_7, %c0_8] : memref<1x8x128xf32, #tpu.memory_space<vmem>>, vector<1x8x128xf32>
    %20 = vector.shape_cast %18 : vector<8x128xf32> to vector<1x8x128xf32>
    %21 = arith.addf %19, %20 : vector<1x8x128xf32>
    %c0_9 = arith.constant 0 : index
    %c0_10 = arith.constant 0 : index
    %c0_11 = arith.constant 0 : index
    %22 = vector.load %arg4[%c0_9, %c0_10, %c0_11] : memref<1x8x128xf32, #tpu.memory_space<vmem>>, vector<1x8x128xf32>
    tpu.vector_store %arg4[%c0_9, %c0_10, %c0_11], %21 {strides = array<i32>} : memref<1x8x128xf32, #tpu.memory_space<vmem>>, vector<1x8x128xf32>,
    return
  }
  func.func @transform_0(%arg0: i32, %arg1: i32) -> (i32, i32) {
    %c1_i32 = arith.constant 1 : i32
    %0 = arith.muli %arg0, %c1_i32 : i32
    %1 = arith.addi %0, %arg1 : i32
    %c0_i32 = arith.constant 0 : i32
    %2 = arith.minsi %1, %c0_i32 : i32
    %c0_i32_0 = arith.constant 0 : i32
    %c0_i32_1 = arith.constant 0 : i32
    return %2, %c0_i32_0 : i32, i32
  }
  func.func @transform_1(%arg0: i32, %arg1: i32) -> (i32, i32) {
    %c1_i32 = arith.constant 1 : i32
    %0 = arith.muli %arg0, %c1_i32 : i32
    %1 = arith.addi %0, %arg1 : i32
    %c0_i32 = arith.constant 0 : i32
    %2 = arith.minsi %1, %c0_i32 : i32
    %c0_i32_0 = arith.constant 0 : i32
    %c0_i32_1 = arith.constant 0 : i32
    return %2, %c0_i32_0 : i32, i32
  }
  func.func @transform_2(%arg0: i32, %arg1: i32) -> (i32, i32, i32) {
    %c0_i32 = arith.constant 0 : i32
    %c0_i32_0 = arith.constant 0 : i32
    %c0_i32_1 = arith.constant 0 : i32
    return %arg0, %c0_i32, %c0_i32_0 : i32, i32, i32
  }
}

</mosaic_0001>

<llo_original>
// kernel: tpu_custom_call.1
$region0: #{tpu_custom_call.1}
  #allocation0 [shape = 'u32[]', space=smem, size = 0x4, offset = 0x4, fixed_abs, tag = 'smem constant byte address 0x4 - core index']
  #allocation1 [shape = 'u32[144,128]{1,0:T(1,128)}', space=vmem, size = 0x12000, scoped, tag = 'internal scratch']
  %s0 = inlined_call_operand.hbm [shape: f32[16,128], index: 0, kind: input, shape index: {}]
  %s1 = inlined_call_operand.hbm [shape: f32[16,128], index: 1, kind: input, shape index: {}]
  %s2 = inlined_call_operand.hbm [shape: f32[2,8,128], index: 2, kind: output, shape index: {}]
  %s3 = sld [smem:[#allocation0]]
  $region53: #{tpu_custom_call.1} parent=0
    _
  %s5 = ssub.s32 1, %s3
  %s6 = scalar_select 0, %s5, %s3
  $region1: #{tpu_custom_call.1} parent=0
    #allocation2 [shape = 'u8[16384]{0}', space=vmem, size = 0x4000, scoped, tag = 'input window, operand 0']
    #allocation3 [shape = 's32[2]{0}', space=sflag, size = 0x8, scoped, tag = 'scoped memory for tpu_custom_call.1']
    #allocation4 [shape = 's32[2]{0}', space=sflag, size = 0x8, scoped, tag = 'scoped memory for tpu_custom_call.1']
    #allocation5 [shape = 'u8[16384]{0}', space=vmem, size = 0x4000, scoped, tag = 'input window, operand 1']
    #allocation6 [shape = 's32[2]{0}', space=sflag, size = 0x8, scoped, tag = 'scoped memory for tpu_custom_call.1']
    #allocation7 [shape = 'u8[8192]{0}', space=vmem, size = 0x2000, scoped, tag = 'output window, operand 0']
    %7 = vsyncpa [#allocation3], 0
    %s8 = scalar_lea.sflag [#allocation3], 1
    %9 = vsyncpa %s8, 0
    %10 = vsyncpa [#allocation6], 0
    %s11 = scalar_lea.sflag [#allocation6], 1
    %12 = vsyncpa %s11, 0
    %13 = vsyncpa [#allocation4], 0
    %s14 = scalar_lea.sflag [#allocation4], 1
    %15 = vsyncpa %s14, 0
    loop: start=0, step=1, limit=4
    $region2: #{tpu_custom_call.1} parent=1 // loop_pre_header
      _
    $region3: #{tpu_custom_call.1} parent=1 // loop_header
      %s17 = sphi 0, %s21
      %p18 = scmp.ge.s32.totalorder %s17, 4
      %s24 = sphi 0, %s36
      %s25 = sphi 0, %s32
      %s26 = sphi 0, %s24
      %s27 = sphi 0, %s25
      %s28 = sphi 0, %s26
      %s29 = sphi 0, %s27
      %s45 = sphi 0, %s47
      %s48 = sphi 0, %s45
      %s49 = sphi 0, %s48
      %s65 = sphi 0, %s49
      %s77 = sphi 0, %s79
      %s80 = sphi 0, %s77
      %s81 = sphi 0, %s80
      %s97 = sphi 0, %s81
      %s103 = sphi 0, %s105
      %s106 = sphi 0, %s103
      %s107 = sphi 0, %s106
      %s123 = sphi 0, %s107
    $region4: #{tpu_custom_call.1} parent=1 // loop_header_branch
      %20 = sbr.rel (%p18) target = $region8
    $region5: #{tpu_custom_call.1} parent=1 // loop_body
      %s22 = ssub.s32 %s17, 1
      %s23 = ssub.s32 %s17, 2
      %s30 = sadd.s32 1, %s25
      %p31 = scmp.ge.s32.totalorder %s30, 1
      %s32 = scalar_select %p31, 0, %s30
      %s33 = sadd.s32 1, %s24
      %s34 = scalar_select %p31, %s33, %s24
      %p35 = scmp.ge.s32.totalorder %s34, 2
      %s36 = scalar_select %p35, 0, %s34
      %s37 = sadd.s32 %s24, %s25
      %p38 = scmp.lt.s32.totalorder %s37, 0
      %s39 = scalar_select %p38, %s37, 0
      %s40 = sadd.s32 %s36, %s32
      %p41 = scmp.lt.s32.totalorder %s40, 0
      %s42 = scalar_select %p41, %s40, 0
      %s43 = ssub.s32 %s39, %s42
      %p44 = scmp.eq.s32.totalorder %s43, 0
      %s46 = sadd.s32 %s45, 1
      %s47 = scalar_select %p44, %s45, %s46
      %p50 = pneg %p44
      %p51 = scmp.eq.s32.totalorder %s17, 1
      %p52 = por %p50, %p51
      %p53 = scmp.ne.s32.totalorder %s45, %s48
      %p54 = scmp.eq.s32.totalorder %s17, 0
      %p55 = por %p53, %p54
      %p56 = scmp.ne.s32.totalorder %s45, %s48
      %p57 = scmp.eq.s32.totalorder %s22, 1
      %p58 = por %p56, %p57
      %p59 = scmp.ne.s32.totalorder %s48, %s49
      %p60 = scmp.eq.s32.totalorder %s22, 0
      %p61 = por %p59, %p60
      %p62 = scmp.ne.s32.totalorder %s48, %s49
      %p63 = scmp.eq.s32.totalorder %s23, 1
      %p64 = por %p62, %p63
      %p66 = scmp.ne.s32.totalorder %s49, %s65
      %p67 = scmp.eq.s32.totalorder %s23, 0
      %p68 = por %p66, %p67
      %s69 = sadd.s32 %s24, %s25
      %p70 = scmp.lt.s32.totalorder %s69, 0
      %s71 = scalar_select %p70, %s69, 0
      %s72 = sadd.s32 %s36, %s32
      %p73 = scmp.lt.s32.totalorder %s72, 0
      %s74 = scalar_select %p73, %s72, 0
      %s75 = ssub.s32 %s71, %s74
      %p76 = scmp.eq.s32.totalorder %s75, 0
      %s78 = sadd.s32 %s77, 1
      %s79 = scalar_select %p76, %s77, %s78
      %p82 = pneg %p76
      %p83 = scmp.eq.s32.totalorder %s17, 1
      %p84 = por %p82, %p83
      %p85 = scmp.ne.s32.totalorder %s77, %s80
      %p86 = scmp.eq.s32.totalorder %s17, 0
      %p87 = por %p85, %p86
      %p88 = scmp.ne.s32.totalorder %s77, %s80
      %p89 = scmp.eq.s32.totalorder %s22, 1
      %p90 = por %p88, %p89
      %p91 = scmp.ne.s32.totalorder %s80, %s81
      %p92 = scmp.eq.s32.totalorder %s22, 0
      %p93 = por %p91, %p92
      %p94 = scmp.ne.s32.totalorder %s80, %s81
      %p95 = scmp.eq.s32.totalorder %s23, 1
      %p96 = por %p94, %p95
      %p98 = scmp.ne.s32.totalorder %s81, %s97
      %p99 = scmp.eq.s32.totalorder %s23, 0
      %p100 = por %p98, %p99
      %s101 = ssub.s32 %s24, %s36
      %p102 = scmp.eq.s32.totalorder %s101, 0
      %s104 = sadd.s32 %s103, 1
      %s105 = scalar_select %p102, %s103, %s104
      %p108 = pneg %p102
      %p109 = scmp.eq.s32.totalorder %s17, 1
      %p110 = por %p108, %p109
      %p111 = scmp.ne.s32.totalorder %s103, %s106
      %p112 = scmp.eq.s32.totalorder %s17, 0
      %p113 = por %p111, %p112
      %p114 = scmp.ne.s32.totalorder %s103, %s106
      %p115 = scmp.eq.s32.totalorder %s22, 1
      %p116 = por %p114, %p115
      %p117 = scmp.ne.s32.totalorder %s106, %s107
      %p118 = scmp.eq.s32.totalorder %s22, 0
      %p119 = por %p117, %p118
      %p120 = scmp.ne.s32.totalorder %s106, %s107
      %p121 = scmp.eq.s32.totalorder %s23, 1
      %p122 = por %p120, %p121
      %p124 = scmp.ne.s32.totalorder %s107, %s123
      %p125 = scmp.eq.s32.totalorder %s23, 0
      %p126 = por %p124, %p125
      %p127 = scmp.le.s32.totalorder 1, %s17
      %p128 = scmp.lt.s32.totalorder %s17, 3
      %p129 = pnand %p127, %p128
      %p130 = pneg %p129
      // Predicated region
      $region9: #{tpu_custom_call.1} parent=5 // pred_check
        _
      $region10: #{tpu_custom_call.1} parent=5 // pred_check_branch
        %132 = sbr.rel (%p129) target = $region12
      $region11: #{tpu_custom_call.1} parent=5 // pred_region
        %s133 = ssub.s32 %s17, 1
      $region12: #{tpu_custom_call.1} parent=5 // pred_fallthru
        _
      %p134 = scmp.lt.s32.totalorder %s17, 2
      // Predicated region
      $region13: #{tpu_custom_call.1} parent=5 // pred_check
        %p135 = pneg %p134
      $region14: #{tpu_custom_call.1} parent=5 // pred_check_branch
        %137 = sbr.rel (%p135) target = $region16
      $region15: #{tpu_custom_call.1} parent=5 // pred_region
        // Predicated region
        $region17: #{tpu_custom_call.1} parent=15 // pred_check
          %p138 = pneg %p55
        $region18: #{tpu_custom_call.1} parent=15 // pred_check_branch
          %140 = sbr.rel (%p138) target = $region20
        $region19: #{tpu_custom_call.1} parent=15 // pred_region
          %s141 = sand.u32 %s45, 1
          %s142 = scalar_lea.sflag [#allocation3], %s141
          %s143 = sand.u32 %s45, 1
          %s144 = smul.addr %s143, 16
          %s145 = scalar_lea.vmem [#allocation2], %s144
          %s146 = sadd.s32 %s24, %s25
          %p147 = scmp.lt.s32.totalorder %s146, 0
          %s148 = scalar_select %p147, %s146, 0
          %s149 = smul.u32 2, %s148
          %s151 = ssub.s32 256, 256
          %152 = vsyncadd %s142, %s151
          %s153 = smul.addr %s149, 128
          %s154 = scalar_lea.hbm %s0, %s153
          %s155 = sshll.u32 %s145, 4
          %s156 = int_to_ptr.vmem [resolvable:$true] %s155
          %161 = dma.hbm_to_vmem [thread:$0]  %s154, 256, %s156, %s142, 128, 128, 8
        $region20: #{tpu_custom_call.1} parent=15 // pred_fallthru
          _
        // Predicated region
        $region21: #{tpu_custom_call.1} parent=15 // pred_check
          %p162 = pneg %p87
        $region22: #{tpu_custom_call.1} parent=15 // pred_check_branch
          %164 = sbr.rel (%p162) target = $region24
        $region23: #{tpu_custom_call.1} parent=15 // pred_region
          %s165 = sand.u32 %s77, 1
          %s166 = scalar_lea.sflag [#allocation6], %s165
          %s167 = sand.u32 %s77, 1
          %s168 = smul.addr %s167, 16
          %s169 = scalar_lea.vmem [#allocation5], %s168
          %s170 = sadd.s32 %s24, %s25
          %p171 = scmp.lt.s32.totalorder %s170, 0
          %s172 = scalar_select %p171, %s170, 0
          %s173 = smul.u32 2, %s172
          %s175 = ssub.s32 256, 256
          %176 = vsyncadd %s166, %s175
          %s177 = smul.addr %s173, 128
          %s178 = scalar_lea.hbm %s1, %s177
          %s179 = sshll.u32 %s169, 4
          %s180 = int_to_ptr.vmem [resolvable:$true] %s179
          %185 = dma.hbm_to_vmem [thread:$0]  %s178, 256, %s180, %s166, 128, 128, 8
        $region24: #{tpu_custom_call.1} parent=15 // pred_fallthru
          _
      $region16: #{tpu_custom_call.1} parent=5 // pred_fallthru
        _
      %p186 = scmp.le.s32.totalorder 1, %s17
      %p187 = scmp.lt.s32.totalorder %s17, 3
      %p188 = pnand %p186, %p187
      %p189 = pneg %p188
      // Predicated region
      $region25: #{tpu_custom_call.1} parent=5 // pred_check
        _
      $region26: #{tpu_custom_call.1} parent=5 // pred_check_branch
        %191 = sbr.rel (%p188) target = $region28
      $region27: #{tpu_custom_call.1} parent=5 // pred_region
        %s192 = ssub.s32 %s17, 1
        %s193 = sand.u32 %s48, 1
        %s194 = scalar_lea.sflag [#allocation3], %s193
        %s195 = sand.u32 %s48, 1
        %s196 = smul.addr %s195, 16
        %s197 = scalar_lea.vmem [#allocation2], %s196
        // Predicated region
        $region29: #{tpu_custom_call.1} parent=27 // pred_check
          %p198 = pneg %p61
        $region30: #{tpu_custom_call.1} parent=27 // pred_check_branch
          %200 = sbr.rel (%p198) target = $region32
        $region31: #{tpu_custom_call.1} parent=27 // pred_region
          %201 = dma.done %s194, 256
        $region32: #{tpu_custom_call.1} parent=27 // pred_fallthru
          _
        %s202 = sand.u32 %s80, 1
        %s203 = scalar_lea.sflag [#allocation6], %s202
        %s204 = sand.u32 %s80, 1
        %s205 = smul.addr %s204, 16
        %s206 = scalar_lea.vmem [#allocation5], %s205
        // Predicated region
        $region33: #{tpu_custom_call.1} parent=27 // pred_check
          %p207 = pneg %p93
        $region34: #{tpu_custom_call.1} parent=27 // pred_check_branch
          %209 = sbr.rel (%p207) target = $region36
        $region35: #{tpu_custom_call.1} parent=27 // pred_region
          %210 = dma.done %s203, 256
        $region36: #{tpu_custom_call.1} parent=27 // pred_fallthru
          _
        %s211 = sand.u32 %s48, 1
        %s212 = scalar_lea.sflag [#allocation3], %s211
        %s213 = sand.u32 %s48, 1
        %s214 = smul.addr %s213, 16
        %s215 = scalar_lea.vmem [#allocation2], %s214
        %p216 = pneg %p61
        %p217 = pneg %p58
        %s218 = sand.u32 %s80, 1
        %s219 = scalar_lea.sflag [#allocation6], %s218
        %s220 = sand.u32 %s80, 1
        %s221 = smul.addr %s220, 16
        %s222 = scalar_lea.vmem [#allocation5], %s221
        %p223 = pneg %p93
        %p224 = pneg %p90
        %p225 = pneg %p119
        %p226 = pneg %p116
        %s227 = sand.u32 %s106, 1
        %s228 = scalar_lea.sflag [#allocation4], %s227
        %s229 = sand.u32 %s106, 1
        %s230 = smul.addr %s229, 8
        %s231 = scalar_lea.vmem [#allocation7], %s230
        %s232 = sadd.s32 %s26, %s27
        %p233 = scmp.lt.s32.totalorder %s232, 0
        %s234 = scalar_select %p233, %s232, 0
        %s235 = smul.u32 2, %s234
        %s236 = sadd.s32 %s26, %s27
        %p237 = scmp.lt.s32.totalorder %s236, 0
        %s238 = scalar_select %p237, %s236, 0
        %s239 = smul.u32 2, %s238
        %p240 = scmp.eq.s32.totalorder %s27, 0
        // Predicated region
        $region37: #{tpu_custom_call.1} parent=27 // pred_check
          %p241 = pneg %p240
        $region38: #{tpu_custom_call.1} parent=27 // pred_check_branch
          %243 = sbr.rel (%p241) target = $region40
        $region39: #{tpu_custom_call.1} parent=27 // pred_region
          %244 = vst [vmem:[%s231] sm:$0xff] 0.0
        $region40: #{tpu_custom_call.1} parent=27 // pred_fallthru
          _
        %s245 = sadd.s32 %s26, %s27
        %s246 = smul.u32 %s245, 16
        %v247 = vlaneseq
        %v248 = vshrl.u32 %v247, 7
        %v249 = vadd.s32 %v248, 8
        %v250 = vstv %s246
        %v251 = vadd.s32 %v248, %v250
        %v252 = vadd.s32 %v249, %v250
        %vm253 = vcmp.lt.s32.totalorder %v251, 16
        %vm254 = vcmp.lt.s32.totalorder %v252, 16
        %v255 = vld [vmem:[%s197] sm:$0xff]
        %v256 = vld [vmem:[%s197 + $0x8] sm:$0xff]
        %v257 = vld [vmem:[%s206] sm:$0xff]
        %v258 = vld [vmem:[%s206 + $0x8] sm:$0xff]
        %v259 = vsub.f32 %v255, %v257
        %v260 = vsub.f32 %v256, %v258
        %v261 = vsel %vm253, %v259, 0.0
        %v262 = vsel %vm254, %v260, 0.0
        %v263 = vmul.f32 %v261, %v261
        %v264 = vmul.f32 %v262, %v262
        %v265 = vadd.f32 %v263, %v264
        %v266 = vld [vmem:[%s231] sm:$0xff]
        %v267 = vadd.f32 %v266, %v265
        %268 = vst [vmem:[%s231] sm:$0xff] %v267
        %s269 = sand.u32 %s106, 1
        %s270 = scalar_lea.sflag [#allocation4], %s269
        %s271 = sand.u32 %s106, 1
        %s272 = smul.addr %s271, 8
        %s273 = scalar_lea.vmem [#allocation7], %s272
        // Predicated region
        $region41: #{tpu_custom_call.1} parent=27 // pred_check
          %p274 = pneg %p116
        $region42: #{tpu_custom_call.1} parent=27 // pred_check_branch
          %276 = sbr.rel (%p274) target = $region44
        $region43: #{tpu_custom_call.1} parent=27 // pred_region
          %s278 = ssub.s32 128, 128
          %279 = vsyncadd %s270, %s278
          %s280 = smul.addr %s26, 128
          %s281 = scalar_lea.hbm %s2, %s280
          %s283 = sshll.u32 %s273, 4
          %s284 = int_to_ptr.vmem [resolvable:$true] %s283
          %286 = dma.vmem_to_hbm [thread:$0]  %s284, 128, %s281, %s270
        $region44: #{tpu_custom_call.1} parent=27 // pred_fallthru
          _
      $region28: #{tpu_custom_call.1} parent=5 // pred_fallthru
        _
      %p287 = scmp.le.s32.totalorder 2, %s17
      // Predicated region
      $region45: #{tpu_custom_call.1} parent=5 // pred_check
        %p288 = pneg %p287
      $region46: #{tpu_custom_call.1} parent=5 // pred_check_branch
        %290 = sbr.rel (%p288) target = $region48
      $region47: #{tpu_custom_call.1} parent=5 // pred_region
        %s291 = ssub.s32 %s17, 2
        // Predicated region
        $region49: #{tpu_custom_call.1} parent=47 // pred_check
          %p292 = pneg %p122
        $region50: #{tpu_custom_call.1} parent=47 // pred_check_branch
          %294 = sbr.rel (%p292) target = $region52
        $region51: #{tpu_custom_call.1} parent=47 // pred_region
          %s295 = sand.u32 %s107, 1
          %s296 = scalar_lea.sflag [#allocation4], %s295
          %s297 = sand.u32 %s107, 1
          %s298 = smul.addr %s297, 8
          %s299 = scalar_lea.vmem [#allocation7], %s298
          %300 = dma.done %s296, 128
        $region52: #{tpu_custom_call.1} parent=47 // pred_fallthru
          _
      $region48: #{tpu_custom_call.1} parent=5 // pred_fallthru
        _
    $region6: #{tpu_custom_call.1} parent=1 // loop_footer
      %s21 = sadd.s32 1, %s17
    $region7: #{tpu_custom_call.1} parent=1 // loop_footer_branch
      %16 = sbr.rel target = $region3
    $region8: #{tpu_custom_call.1} parent=1 // loop_exit
      _
    %301 = vsyncpa [#allocation3], 1
    %s302 = scalar_lea.sflag [#allocation3], 1
    %303 = vsyncpa %s302, 1
    %304 = vsyncpa [#allocation6], 1
    %s305 = scalar_lea.sflag [#allocation6], 1
    %306 = vsyncpa %s305, 1
    %307 = vsyncpa [#allocation4], 1
    %s308 = scalar_lea.sflag [#allocation4], 1
    %309 = vsyncpa %s308, 1

</llo_original>
